<compile_context>
chip_gen: v6e
topology: v6e:2x2x1
jax: 0.10.0
libtpu: 0.0.40
codegen_flags: <defaults>
</compile_context>

<pallas_src>
import functools

import jax
import jax.numpy as jnp
from jax.experimental import pallas as pl
from jax.experimental.pallas import tpu as pltpu


def _gem_kernel_static_p(x_ref, o_ref, *, eps, inv_hw, p_int):
    # x_ref : VMEM (TILE_NC, HW)  - flattened feature planes (one row per plane)
    # o_ref : VMEM (TILE_NC, 1)   - pooled output per plane
    x = x_ref[...].astype(jnp.float32)
    x = jnp.maximum(x, eps)                       # clamp(min=eps)
    xp = x
    for _ in range(p_int - 1):                    # x ** p via VPU multiplies
        xp = xp * x
    m = jnp.sum(xp, axis=-1, keepdims=True) * inv_hw   # avg over spatial (XLU)
    # Final 1/p root only on the tiny per-row result.
    o_ref[...] = jnp.power(m, 1.0 / p_int).astype(o_ref.dtype)


def _gem_kernel_runtime_p(p_ref, x_ref, o_ref, *, eps, inv_hw):
    # p_ref : SMEM (1,)           - the (learned) GeM exponent p
    # x_ref : VMEM (TILE_NC, HW)
    # o_ref : VMEM (TILE_NC, 1)
    p = p_ref[0]
    inv_p = 1.0 / p                               # scalar, computed once
    x = x_ref[...].astype(jnp.float32)
    x = jnp.maximum(x, eps)                       # keeps log() argument > 0
    xp = jnp.exp(p * jnp.log(x))                  # x ** p (runtime exponent)
    m = jnp.sum(xp, axis=-1, keepdims=True) * inv_hw
    o_ref[...] = jnp.exp(inv_p * jnp.log(m)).astype(o_ref.dtype)


def _pick_tile_nc(nc, hw, itemsize, target_bytes=2 * 1024 * 1024):
    """~2 MiB per input buffer (x2 for double buffering), rows multiple of 8."""
    rows = (target_bytes // max(hw * itemsize, 1)) // 8 * 8
    rows = max(8, min(1024, rows))
    nc_rounded = ((nc + 7) // 8) * 8
    return int(min(rows, nc_rounded))


def gem_forward(x, p=None, eps=1e-6, static_p=None, tile_nc=None):
    """GeM pooling.  x: (N, C, H, W).  Returns (N, C, 1, 1).

    If `static_p` is given (e.g. the PyTorch default 3) the exponent is
    specialized at trace time (VPU-only fast path); otherwise `p` must be a
    (1,) array and the generic runtime-p path is used.
    """
    N, C, H, W = x.shape
    nc, hw = N * C, H * W
    x2 = x.reshape(nc, hw)
    itemsize = jnp.dtype(x2.dtype).itemsize

    if tile_nc is None:
        tile_nc = _pick_tile_nc(nc, hw, itemsize)
    grid = (pl.cdiv(nc, tile_nc),)

    out_shape = jax.ShapeDtypeStruct((nc, 1), x.dtype)
    compiler_params = pltpu.CompilerParams(
        dimension_semantics=("parallel",),        # shard rows across TCs (v7x)
        vmem_limit_bytes=32 * 1024 * 1024,        # explicit, portable to v7x
    )

    x_spec = pl.BlockSpec((tile_nc, hw), lambda i: (i, 0))
    o_spec = pl.BlockSpec((tile_nc, 1), lambda i: (i, 0))

    if static_p is not None and float(static_p) == int(static_p) and int(static_p) >= 1:
        p_int = int(static_p)
        kernel = functools.partial(
            _gem_kernel_static_p, eps=eps, inv_hw=1.0 / hw, p_int=p_int)
        cost = pl.CostEstimate(
            flops=nc * hw * (p_int + 2),
            transcendentals=2 * nc,
            bytes_accessed=nc * hw * itemsize + nc * itemsize,
        )
        out = pl.pallas_call(
            kernel,
            out_shape=out_shape,
            grid=grid,
            in_specs=[x_spec],
            out_specs=o_spec,
            compiler_params=compiler_params,
            cost_estimate=cost,
        )(x2)
    else:
        assert p is not None, "runtime path needs the (1,) exponent array p"
        p_arr = jnp.asarray(p, dtype=jnp.float32).reshape((1,))
        kernel = functools.partial(
            _gem_kernel_runtime_p, eps=eps, inv_hw=1.0 / hw)
        cost = pl.CostEstimate(
            flops=nc * hw * 4,
            transcendentals=2 * nc * hw + 2 * nc,
            bytes_accessed=nc * hw * itemsize + nc * itemsize + 4,
        )
        out = pl.pallas_call(
            kernel,
            out_shape=out_shape,
            grid=grid,
            in_specs=[
                pl.BlockSpec(memory_space=pltpu.MemorySpace.SMEM),  # scalar p
                x_spec,
            ],
            out_specs=o_spec,
            compiler_params=compiler_params,
            cost_estimate=cost,
        )(p_arr, x2)

    return out.reshape(N, C, 1, 1)


def gem_reference(x, p, eps=1e-6):
    xc = jnp.maximum(x.astype(jnp.float32), eps)
    xp = jnp.power(xc, p[0])
    m = jnp.mean(xp, axis=(-2, -1), keepdims=True)
    return jnp.power(m, 1.0 / p[0]).astype(x.dtype)


if __name__ == "__main__":
    key = jax.random.PRNGKey(0)
    N, C, H, W = 2, 4, 16, 16
    x = jax.random.normal(key, (N, C, H, W), dtype=jnp.float32)

    # Deterministic parameter init, matching nn.Parameter(torch.ones(1) * 3)
    p = jnp.ones((1,), dtype=jnp.float32) * 3.0
    eps = 1e-6

    y_ref = gem_reference(x, p, eps)

    # Fast path: statically-known integer exponent (the PyTorch default p=3).
    y_fast = jax.block_until_ready(gem_forward(x, eps=eps, static_p=3))
    assert y_fast.shape == (N, C, 1, 1), y_fast.shape
    assert jnp.allclose(y_fast, y_ref, atol=1e-4, rtol=1e-4), (y_fast, y_ref)

    # Generic path: runtime (learned) exponent streamed through SMEM.
    y_gen = jax.block_until_ready(gem_forward(x, p, eps=eps))
    assert y_gen.shape == (N, C, 1, 1), y_gen.shape
    assert jnp.allclose(y_gen, y_ref, atol=1e-4, rtol=1e-4), (y_gen, y_ref)

    print("KERNEL_OK")
</pallas_src>

<mosaic_0001>
module attributes {stable_mosaic.version = 11 : i64} {
  func.func @_gem_kernel_static_p(%arg0: i32, %arg1: memref<8x256xf32, #tpu.memory_space<vmem>>, %arg2: memref<8x1xf32, #tpu.memory_space<vmem>>) attributes {dimension_semantics = [#tpu.dimension_semantics<parallel>], iteration_bounds = array<i64: 1>, scalar_prefetch = 0 : i64, scratch_operands = 0 : i64, tpu.core_type = #tpu.core_type<tc>, window_params = [{transform_indices = @transform_0, window_bounds = array<i64: 8, 256>}, {transform_indices = @transform_1, window_bounds = array<i64: 8, 1>}]} {
    %c0 = arith.constant 0 : index
    %c0_0 = arith.constant 0 : index
    %0 = vector.load %arg1[%c0, %c0_0] : memref<8x256xf32, #tpu.memory_space<vmem>>, vector<8x256xf32>
    %cst = arith.constant 9.99999997E-7 : f32
    %1 = vector.broadcast %cst : f32 to vector<8x256xf32>
    %2 = arith.maximumf %0, %1 : vector<8x256xf32>
    %3 = arith.mulf %2, %2 : vector<8x256xf32>
    %4 = arith.mulf %3, %2 : vector<8x256xf32>
    %cst_1 = arith.constant dense<0.000000e+00> : vector<8xf32>
    %5 = vector.multi_reduction <add>, %4, %cst_1 [1] : vector<8x256xf32> to vector<8xf32>
    %6 = vector.shape_cast %5 : vector<8xf32> to vector<8x1xf32>
    %cst_2 = arith.constant 3.906250e-03 : f32
    %7 = vector.broadcast %cst_2 : f32 to vector<8x1xf32>
    %8 = arith.mulf %6, %7 : vector<8x1xf32>
    %cst_3 = arith.constant 0.333333343 : f32
    %9 = vector.broadcast %cst_3 : f32 to vector<8x1xf32>
    %10 = math.powf %8, %9 : vector<8x1xf32>
    %c0_4 = arith.constant 0 : index
    %c0_5 = arith.constant 0 : index
    %11 = vector.load %arg2[%c0_4, %c0_5] : memref<8x1xf32, #tpu.memory_space<vmem>>, vector<8x1xf32>
    tpu.vector_store %arg2[%c0_4, %c0_5], %10 {strides = array<i32>} : memref<8x1xf32, #tpu.memory_space<vmem>>, vector<8x1xf32>,
    return
  }
  func.func @transform_0(%arg0: i32) -> (i32, i32) {
    %c0_i32 = arith.constant 0 : i32
    %c0_i32_0 = arith.constant 0 : i32
    return %arg0, %c0_i32 : i32, i32
  }
  func.func @transform_1(%arg0: i32) -> (i32, i32) {
    %c0_i32 = arith.constant 0 : i32
    %c0_i32_0 = arith.constant 0 : i32
    return %arg0, %c0_i32 : i32, i32
  }
}

</mosaic_0001>

<llo_original>
// kernel: tpu_custom_call.1
$region0: #{tpu_custom_call.1}
  #allocation0 [shape = 'u32[]', space=smem, size = 0x4, offset = 0x4, fixed_abs, tag = 'smem constant byte address 0x4 - core index']
  #allocation1 [shape = 'u32[144,128]{1,0:T(1,128)}', space=vmem, size = 0x12000, scoped, tag = 'internal scratch']
  %s0 = inlined_call_operand.hbm [shape: f32[8,256], index: 0, kind: input, shape index: {}]
  %s1 = inlined_call_operand.vmem [shape: f32[8,1], index: 1, kind: output, shape index: {}]
  %s2 = sld [smem:[#allocation0]]
  $region18: #{tpu_custom_call.1} parent=0
    _
  %s4 = ssub.s32 1, %s2
  %s5 = scalar_select 0, %s4, %s2
  $region1: #{tpu_custom_call.1} parent=0
    #allocation2 [shape = 'u8[8192]{0}', space=vmem, size = 0x2000, scoped, tag = 'input window, operand 0, single buffered']
    #allocation3 [shape = 's32[1]{0}', space=sflag, size = 0x4, scoped, tag = 'scoped memory for tpu_custom_call.1']
    %6 = vsyncpa [#allocation3], 0
    // Predicated region
    $region2: #{tpu_custom_call.1} parent=1 // pred_check
      _
    $region3: #{tpu_custom_call.1} parent=1 // pred_check_branch
      %8 = sbr.rel (0) target = $region5
    $region4: #{tpu_custom_call.1} parent=1 // pred_region
      %s10 = ssub.s32 256, 256
      %11 = vsyncadd [#allocation3], %s10
      %s13 = sshll.u32 [#allocation2], 4
      %s14 = int_to_ptr.vmem [resolvable:$true] %s13
      %16 = dma.hbm_to_vmem [thread:$0]  %s0, 256, %s14, [#allocation3]
    $region5: #{tpu_custom_call.1} parent=1 // pred_fallthru
      _
    // Predicated region
    $region6: #{tpu_custom_call.1} parent=1 // pred_check
      _
    $region7: #{tpu_custom_call.1} parent=1 // pred_check_branch
      %18 = sbr.rel (0) target = $region9
    $region8: #{tpu_custom_call.1} parent=1 // pred_region
      %19 = dma.done [#allocation3], 256
    $region9: #{tpu_custom_call.1} parent=1 // pred_fallthru
      _
    %v20 = vld [vmem:[#allocation2] sm:$0xff]
    %v21 = vld [vmem:[#allocation2 + $0x8] sm:$0xff]
    %v22 = vmax.f32 %v20, 1e-06
    %v23 = vmax.f32 %v21, 1e-06
    %v24 = vmul.f32 %v22, %v22
    %v25 = vmul.f32 %v23, %v23
    %v26 = vmul.f32 %v24, %v22
    %v27 = vmul.f32 %v25, %v23
    %v28 = vadd.f32 %v26, %v27
    %29 = vadd.xlane.f32.xlu0 %v28
    %v30 = vpop.xlane.xlu0 %29
    %v31 = vmul.f32 %v30, 0.00390625
    %v32 = vpow.f32 %v31, 0.33333334
    %vm33 = vcmask 7168
    %34 = vst.msk [vmem:[%s1] sm:$0xff] %vm33, %v32
    // Predicated region
    $region10: #{tpu_custom_call.1} parent=1 // pred_check
      _
    $region11: #{tpu_custom_call.1} parent=1 // pred_check_branch
      %36 = sbr.rel (0) target = $region13
    $region12: #{tpu_custom_call.1} parent=1 // pred_region
      _
    $region13: #{tpu_custom_call.1} parent=1 // pred_fallthru
      _
    // Predicated region
    $region14: #{tpu_custom_call.1} parent=1 // pred_check
      _
    $region15: #{tpu_custom_call.1} parent=1 // pred_check_branch
      %38 = sbr.rel (0) target = $region17
    $region16: #{tpu_custom_call.1} parent=1 // pred_region
      _
    $region17: #{tpu_custom_call.1} parent=1 // pred_fallthru
      _
    %39 = vsyncpa [#allocation3], 1

</llo_original>
